<compile_context>
chip_gen: v7x
topology: tpu7x:2x2x1
jax: 0.10.0
libtpu: 0.0.40
codegen_flags: <defaults>
</compile_context>

<pallas_src>
import jax
import jax.numpy as jnp
from jax.experimental import pallas as pl
from jax.experimental.pallas import tpu as pltpu


def _round_up(x: int, m: int) -> int:
    return (x + m - 1) // m * m


def _cdiv(a: int, b: int) -> int:
    return (a + b - 1) // b


def _conv1x1_kernel(w_ref, b_ref, x_ref, o_ref):
    """Per-tile 1x1 conv.

    w_ref: (C_out, C_in) f32 in SMEM (scalar weights)
    b_ref: (C_out,)      f32 in SMEM (scalar bias)
    x_ref: (Nb, C_in,  Rt, 128) VMEM input block  (dense (Rt,128) tiles)
    o_ref: (Nb, C_out, Rt, 128) VMEM output block
    """
    c_out, c_in = w_ref.shape          # static: (3,3) or (5,3)
    for co in range(c_out):
        # Broadcast-FMA over fully dense (Nb, 1, Rt, 128) slabs: full vreg
        # occupancy on the VPU; f32 accumulation regardless of I/O dtype.
        acc = x_ref[:, 0:1, :, :].astype(jnp.float32) * w_ref[co, 0]
        for ci in range(1, c_in):
            acc = acc + x_ref[:, ci:ci + 1, :, :].astype(jnp.float32) * w_ref[co, ci]
        # Channel co is a leading (non-tiled) dim of the output block, so this
        # is a full-tile, unmasked store into its own region of the block
        # (equivalent to one full-block store split into C_out dense chunks).
        o_ref[:, co:co + 1, :, :] = (acc + b_ref[co]).astype(o_ref.dtype)


def _mutable_conv1x1(x, w, b, *, row_budget: int = 1024):
    """1x1 conv, NCHW in / NCHW out.

    x: (N, C_in, H, W); w: (C_out, C_in); b: (C_out,).
    Returns (N, C_out, H, W) with x.dtype (f32 accumulation inside).

    row_budget = target Nb*Rt rows (of 128 pixels) per grid step:
      1024 rows -> ~128K pixels/step -> ~4 MiB in+out HBM traffic per step
      (f32, C_out=5) and a double-buffered block footprint of
      2*(C_in+C_out)*rows*512 B ~= 8 MiB, inside every generation's default
      scoped-VMEM limit (16 MiB v5e, 32 MiB v6e/v7x).
    """
    N, C_in, H, W = x.shape
    C_out, _ = w.shape
    P = H * W
    P128 = _round_up(P, 128)

    x3 = x.reshape(N, C_in, P)                     # free reshape (merge H,W)
    if P128 != P:
        # Rare path only: H*W not lane-aligned.  The common case does no
        # padding and no output slicing at all (review item).
        x3 = jnp.pad(x3, ((0, 0), (0, 0), (0, P128 - P)))
    R = P128 // 128
    x4 = x3.reshape(N, C_in, R, 128)               # free reshape (split P)

    # ---- tile selection -------------------------------------------------
    Rt = R if R <= row_budget else row_budget      # full dim, or multiple of 8
    Nb = max(1, min(N, row_budget // Rt))          # batch blocking (review item)
    num_n, num_r = _cdiv(N, Nb), _cdiv(R, Rt)
    # v7x has 2 TensorCores: keep >= 2 'parallel' grid steps when possible so
    # both cores get work; harmless on v5e/v6e.
    if num_n * num_r < 2:
        if N > 1:
            Nb = _cdiv(N, 2)
        elif R >= 16:
            Rt = _round_up(_cdiv(R, 2), 8)
        num_n, num_r = _cdiv(N, Nb), _cdiv(R, Rt)

    y4 = pl.pallas_call(
        _conv1x1_kernel,
        out_shape=jax.ShapeDtypeStruct((N, C_out, R, 128), x.dtype),
        grid=(num_n, num_r),
        in_specs=[
            pl.BlockSpec(memory_space=pltpu.MemorySpace.SMEM),        # weights
            pl.BlockSpec(memory_space=pltpu.MemorySpace.SMEM),        # bias
            pl.BlockSpec((Nb, C_in, Rt, 128), lambda n, r: (n, 0, r, 0)),
        ],
        out_specs=pl.BlockSpec((Nb, C_out, Rt, 128), lambda n, r: (n, 0, r, 0)),
        compiler_params=pltpu.CompilerParams(
            dimension_semantics=("parallel", "parallel")),
    )(w.astype(jnp.float32), b.astype(jnp.float32), x4)

    y3 = y4.reshape(N, C_out, P128)                # free reshape (merge R,128)
    if P128 != P:
        y3 = y3[:, :, :P]
    return y3.reshape(N, C_out, H, W)


class MutableConvPallas:
    """JAX/Pallas port of MutableConv: conv1 = Conv2d(3,3,1), conv2 = Conv2d(3,5,1)."""

    def __init__(self, key):
        k1, k2, k3, k4 = jax.random.split(key, 4)
        # PyTorch weight (C_out, C_in, 1, 1) stored as (C_out, C_in) — exactly
        # the layout the kernel consumes (no transpose anywhere).
        self.w1 = jax.random.normal(k1, (3, 3), jnp.float32) * 0.1
        self.b1 = jax.random.normal(k2, (3,), jnp.float32) * 0.1
        self.w2 = jax.random.normal(k3, (5, 3), jnp.float32) * 0.1
        self.b2 = jax.random.normal(k4, (5,), jnp.float32) * 0.1

    def __call__(self, x, index: int):
        # `index` must be static (the output channel count depends on it),
        # mirroring the Python-level branch in the PyTorch forward.
        N, C, H, W = x.shape
        assert C == 3
        if index == 0:
            w, b = self.w1, self.b1
        else:
            w, b = self.w2, self.b2
        return _mutable_conv1x1(x, w, b)


def _reference(x, w, b):
    # Pure-JAX reference (channels-first), w: (C_out, C_in).
    return jnp.einsum("oi,nihw->nohw", w, x.astype(jnp.float32)) \
        + b[None, :, None, None]


if __name__ == "__main__":
    key = jax.random.PRNGKey(0)
    kp, kx = jax.random.split(key)
    model = MutableConvPallas(kp)

    x = jax.random.normal(kx, (2, 3, 16, 16), jnp.float32)

    y0 = jax.block_until_ready(model(x, index=0))
    y1 = jax.block_until_ready(model(x, index=1))

    assert y0.shape == (2, 3, 16, 16), y0.shape
    assert y1.shape == (2, 5, 16, 16), y1.shape

    r0 = _reference(x, model.w1, model.b1)
    r1 = _reference(x, model.w2, model.b2)
    assert jnp.allclose(y0, r0, atol=1e-5, rtol=1e-5)
    assert jnp.allclose(y1, r1, atol=1e-5, rtol=1e-5)

    # bf16 fast path (halves HBM traffic for this purely memory-bound op);
    # dtype-preserving output, so compare with relaxed tolerance.
    y1_bf16 = jax.block_until_ready(model(x.astype(jnp.bfloat16), index=1))
    assert y1_bf16.shape == (2, 5, 16, 16)
    assert y1_bf16.dtype == jnp.bfloat16
    assert jnp.allclose(y1_bf16.astype(jnp.float32), r1, atol=5e-2, rtol=5e-2)

    print("KERNEL_OK")
</pallas_src>

<mosaic_0001>
module attributes {stable_mosaic.version = 11 : i64} {
  func.func @_conv1x1_kernel(%arg0: i32, %arg1: i32, %arg2: memref<3x3xf32, #tpu.memory_space<smem>>, %arg3: memref<3xf32, #tpu.memory_space<smem>>, %arg4: memref<1x3x2x128xf32, #tpu.memory_space<vmem>>, %arg5: memref<1x3x2x128xf32, #tpu.memory_space<vmem>>) attributes {dimension_semantics = [#tpu.dimension_semantics<parallel>, #tpu.dimension_semantics<parallel>], iteration_bounds = array<i64: 2, 1>, scalar_prefetch = 0 : i64, scratch_operands = 0 : i64, tpu.core_type = #tpu.core_type<tc>, window_params = [{transform_indices = @transform_0, window_bounds = array<i64: 3, 3>}, {transform_indices = @transform_1, window_bounds = array<i64: 3>}, {transform_indices = @transform_2, window_bounds = array<i64: 1, 3, 2, 128>}, {transform_indices = @transform_3, window_bounds = array<i64: 1, 3, 2, 128>}]} {
    %c0 = arith.constant 0 : index
    %c0_0 = arith.constant 0 : index
    %c0_1 = arith.constant 0 : index
    %c0_2 = arith.constant 0 : index
    %0 = vector.load %arg4[%c0, %c0_0, %c0_1, %c0_2] : memref<1x3x2x128xf32, #tpu.memory_space<vmem>>, vector<1x1x2x128xf32>
    %c0_3 = arith.constant 0 : index
    %c0_4 = arith.constant 0 : index
    %1 = memref.load %arg2[%c0_3, %c0_4] : memref<3x3xf32, #tpu.memory_space<smem>>
    %2 = vector.broadcast %1 : f32 to vector<1x1x2x128xf32>
    %3 = arith.mulf %0, %2 : vector<1x1x2x128xf32>
    %c0_5 = arith.constant 0 : index
    %c1 = arith.constant 1 : index
    %c0_6 = arith.constant 0 : index
    %c0_7 = arith.constant 0 : index
    %4 = vector.load %arg4[%c0_5, %c1, %c0_6, %c0_7] : memref<1x3x2x128xf32, #tpu.memory_space<vmem>>, vector<1x1x2x128xf32>
    %c0_8 = arith.constant 0 : index
    %c1_9 = arith.constant 1 : index
    %5 = memref.load %arg2[%c0_8, %c1_9] : memref<3x3xf32, #tpu.memory_space<smem>>
    %6 = vector.broadcast %5 : f32 to vector<1x1x2x128xf32>
    %7 = arith.mulf %4, %6 : vector<1x1x2x128xf32>
    %8 = arith.addf %3, %7 : vector<1x1x2x128xf32>
    %c0_10 = arith.constant 0 : index
    %c2 = arith.constant 2 : index
    %c0_11 = arith.constant 0 : index
    %c0_12 = arith.constant 0 : index
    %9 = vector.load %arg4[%c0_10, %c2, %c0_11, %c0_12] : memref<1x3x2x128xf32, #tpu.memory_space<vmem>>, vector<1x1x2x128xf32>
    %c0_13 = arith.constant 0 : index
    %c2_14 = arith.constant 2 : index
    %10 = memref.load %arg2[%c0_13, %c2_14] : memref<3x3xf32, #tpu.memory_space<smem>>
    %11 = vector.broadcast %10 : f32 to vector<1x1x2x128xf32>
    %12 = arith.mulf %9, %11 : vector<1x1x2x128xf32>
    %13 = arith.addf %8, %12 : vector<1x1x2x128xf32>
    %c0_15 = arith.constant 0 : index
    %14 = memref.load %arg3[%c0_15] : memref<3xf32, #tpu.memory_space<smem>>
    %15 = vector.broadcast %14 : f32 to vector<1x1x2x128xf32>
    %16 = arith.addf %13, %15 : vector<1x1x2x128xf32>
    %c0_16 = arith.constant 0 : index
    %c0_17 = arith.constant 0 : index
    %c0_18 = arith.constant 0 : index
    %c0_19 = arith.constant 0 : index
    %17 = vector.load %arg5[%c0_16, %c0_17, %c0_18, %c0_19] : memref<1x3x2x128xf32, #tpu.memory_space<vmem>>, vector<1x1x2x128xf32>
    tpu.vector_store %arg5[%c0_16, %c0_17, %c0_18, %c0_19], %16 {strides = array<i32>} : memref<1x3x2x128xf32, #tpu.memory_space<vmem>>, vector<1x1x2x128xf32>,
    %c0_20 = arith.constant 0 : index
    %c0_21 = arith.constant 0 : index
    %c0_22 = arith.constant 0 : index
    %c0_23 = arith.constant 0 : index
    %18 = vector.load %arg4[%c0_20, %c0_21, %c0_22, %c0_23] : memref<1x3x2x128xf32, #tpu.memory_space<vmem>>, vector<1x1x2x128xf32>
    %c1_24 = arith.constant 1 : index
    %c0_25 = arith.constant 0 : index
    %19 = memref.load %arg2[%c1_24, %c0_25] : memref<3x3xf32, #tpu.memory_space<smem>>
    %20 = vector.broadcast %19 : f32 to vector<1x1x2x128xf32>
    %21 = arith.mulf %18, %20 : vector<1x1x2x128xf32>
    %c0_26 = arith.constant 0 : index
    %c1_27 = arith.constant 1 : index
    %c0_28 = arith.constant 0 : index
    %c0_29 = arith.constant 0 : index
    %22 = vector.load %arg4[%c0_26, %c1_27, %c0_28, %c0_29] : memref<1x3x2x128xf32, #tpu.memory_space<vmem>>, vector<1x1x2x128xf32>
    %c1_30 = arith.constant 1 : index
    %c1_31 = arith.constant 1 : index
    %23 = memref.load %arg2[%c1_30, %c1_31] : memref<3x3xf32, #tpu.memory_space<smem>>
    %24 = vector.broadcast %23 : f32 to vector<1x1x2x128xf32>
    %25 = arith.mulf %22, %24 : vector<1x1x2x128xf32>
    %26 = arith.addf %21, %25 : vector<1x1x2x128xf32>
    %c0_32 = arith.constant 0 : index
    %c2_33 = arith.constant 2 : index
    %c0_34 = arith.constant 0 : index
    %c0_35 = arith.constant 0 : index
    %27 = vector.load %arg4[%c0_32, %c2_33, %c0_34, %c0_35] : memref<1x3x2x128xf32, #tpu.memory_space<vmem>>, vector<1x1x2x128xf32>
    %c1_36 = arith.constant 1 : index
    %c2_37 = arith.constant 2 : index
    %28 = memref.load %arg2[%c1_36, %c2_37] : memref<3x3xf32, #tpu.memory_space<smem>>
    %29 = vector.broadcast %28 : f32 to vector<1x1x2x128xf32>
    %30 = arith.mulf %27, %29 : vector<1x1x2x128xf32>
    %31 = arith.addf %26, %30 : vector<1x1x2x128xf32>
    %c1_38 = arith.constant 1 : index
    %32 = memref.load %arg3[%c1_38] : memref<3xf32, #tpu.memory_space<smem>>
    %33 = vector.broadcast %32 : f32 to vector<1x1x2x128xf32>
    %34 = arith.addf %31, %33 : vector<1x1x2x128xf32>
    %c0_39 = arith.constant 0 : index
    %c1_40 = arith.constant 1 : index
    %c0_41 = arith.constant 0 : index
    %c0_42 = arith.constant 0 : index
    %35 = vector.load %arg5[%c0_39, %c1_40, %c0_41, %c0_42] : memref<1x3x2x128xf32, #tpu.memory_space<vmem>>, vector<1x1x2x128xf32>
    tpu.vector_store %arg5[%c0_39, %c1_40, %c0_41, %c0_42], %34 {strides = array<i32>} : memref<1x3x2x128xf32, #tpu.memory_space<vmem>>, vector<1x1x2x128xf32>,
    %c0_43 = arith.constant 0 : index
    %c0_44 = arith.constant 0 : index
    %c0_45 = arith.constant 0 : index
    %c0_46 = arith.constant 0 : index
    %36 = vector.load %arg4[%c0_43, %c0_44, %c0_45, %c0_46] : memref<1x3x2x128xf32, #tpu.memory_space<vmem>>, vector<1x1x2x128xf32>
    %c2_47 = arith.constant 2 : index
    %c0_48 = arith.constant 0 : index
    %37 = memref.load %arg2[%c2_47, %c0_48] : memref<3x3xf32, #tpu.memory_space<smem>>
    %38 = vector.broadcast %37 : f32 to vector<1x1x2x128xf32>
    %39 = arith.mulf %36, %38 : vector<1x1x2x128xf32>
    %c0_49 = arith.constant 0 : index
    %c1_50 = arith.constant 1 : index
    %c0_51 = arith.constant 0 : index
    %c0_52 = arith.constant 0 : index
    %40 = vector.load %arg4[%c0_49, %c1_50, %c0_51, %c0_52] : memref<1x3x2x128xf32, #tpu.memory_space<vmem>>, vector<1x1x2x128xf32>
    %c2_53 = arith.constant 2 : index
    %c1_54 = arith.constant 1 : index
    %41 = memref.load %arg2[%c2_53, %c1_54] : memref<3x3xf32, #tpu.memory_space<smem>>
    %42 = vector.broadcast %41 : f32 to vector<1x1x2x128xf32>
    %43 = arith.mulf %40, %42 : vector<1x1x2x128xf32>
    %44 = arith.addf %39, %43 : vector<1x1x2x128xf32>
    %c0_55 = arith.constant 0 : index
    %c2_56 = arith.constant 2 : index
    %c0_57 = arith.constant 0 : index
    %c0_58 = arith.constant 0 : index
    %45 = vector.load %arg4[%c0_55, %c2_56, %c0_57, %c0_58] : memref<1x3x2x128xf32, #tpu.memory_space<vmem>>, vector<1x1x2x128xf32>
    %c2_59 = arith.constant 2 : index
    %c2_60 = arith.constant 2 : index
    %46 = memref.load %arg2[%c2_59, %c2_60] : memref<3x3xf32, #tpu.memory_space<smem>>
    %47 = vector.broadcast %46 : f32 to vector<1x1x2x128xf32>
    %48 = arith.mulf %45, %47 : vector<1x1x2x128xf32>
    %49 = arith.addf %44, %48 : vector<1x1x2x128xf32>
    %c2_61 = arith.constant 2 : index
    %50 = memref.load %arg3[%c2_61] : memref<3xf32, #tpu.memory_space<smem>>
    %51 = vector.broadcast %50 : f32 to vector<1x1x2x128xf32>
    %52 = arith.addf %49, %51 : vector<1x1x2x128xf32>
    %c0_62 = arith.constant 0 : index
    %c2_63 = arith.constant 2 : index
    %c0_64 = arith.constant 0 : index
    %c0_65 = arith.constant 0 : index
    %53 = vector.load %arg5[%c0_62, %c2_63, %c0_64, %c0_65] : memref<1x3x2x128xf32, #tpu.memory_space<vmem>>, vector<1x1x2x128xf32>
    tpu.vector_store %arg5[%c0_62, %c2_63, %c0_64, %c0_65], %52 {strides = array<i32>} : memref<1x3x2x128xf32, #tpu.memory_space<vmem>>, vector<1x1x2x128xf32>,
    return
  }
  func.func @transform_0(%arg0: i32, %arg1: i32) -> (i32, i32) {
    %c0_i32 = arith.constant 0 : i32
    %c0_i32_0 = arith.constant 0 : i32
    %c0_i32_1 = arith.constant 0 : i32
    return %c0_i32, %c0_i32_0 : i32, i32
  }
  func.func @transform_1(%arg0: i32, %arg1: i32) -> i32 {
    %c0_i32 = arith.constant 0 : i32
    %c0_i32_0 = arith.constant 0 : i32
    return %c0_i32 : i32
  }
  func.func @transform_2(%arg0: i32, %arg1: i32) -> (i32, i32, i32, i32) {
    %c0_i32 = arith.constant 0 : i32
    %c0_i32_0 = arith.constant 0 : i32
    %c0_i32_1 = arith.constant 0 : i32
    return %arg0, %c0_i32, %arg1, %c0_i32_0 : i32, i32, i32, i32
  }
  func.func @transform_3(%arg0: i32, %arg1: i32) -> (i32, i32, i32, i32) {
    %c0_i32 = arith.constant 0 : i32
    %c0_i32_0 = arith.constant 0 : i32
    %c0_i32_1 = arith.constant 0 : i32
    return %arg0, %c0_i32, %arg1, %c0_i32_0 : i32, i32, i32, i32
  }
}

</mosaic_0001>

<llo_original>
// kernel: tpu_custom_call.1
$region0: #{tpu_custom_call.1}
  #allocation0 [shape = 'u32[]', space=smem, size = 0x4, offset = 0x4, fixed_abs, tag = 'smem constant byte address 0x4 - core index']
  #allocation1 [shape = 'u32[144,128]{1,0:T(1,128)}', space=vmem, size = 0x12000, scoped, tag = 'internal scratch']
  %s0 = inlined_call_operand.hbm [shape: f32[3,3], index: 0, kind: input, shape index: {}]
  %s1 = inlined_call_operand.vmem [shape: f32[3], index: 1, kind: input, shape index: {}]
  %s2 = inlined_call_operand.hbm [shape: f32[2,3,2,128], index: 2, kind: input, shape index: {}]
  %s3 = inlined_call_operand.hbm [shape: f32[2,3,2,128], index: 3, kind: output, shape index: {}]
  %s4 = sld [smem:[#allocation0]]
  $region57: #{tpu_custom_call.1} parent=0
    _
  %s6 = ssub.s32 1, %s4
  %s7 = scalar_select 0, %s6, %s4
  $region1: #{tpu_custom_call.1} parent=0
    #allocation2 [shape = 'u8[2048]{0}', space=smem, size = 0x800, scoped, tag = 'input window, operand 0, single buffered']
    #allocation3 [shape = 's32[2]{0}', space=sflag, size = 0x8, scoped, tag = 'scoped memory for tpu_custom_call.1']
    #allocation4 [shape = 's32[2]{0}', space=sflag, size = 0x8, scoped, tag = 'scoped memory for tpu_custom_call.1']
    #allocation5 [shape = 's32[2]{0}', space=sflag, size = 0x8, scoped, tag = 'scoped memory for tpu_custom_call.1']
    #allocation6 [shape = 's32[2]{0}', space=sflag, size = 0x8, scoped, tag = 'scoped memory for tpu_custom_call.1']
    #allocation7 [shape = 'u8[512]{0}', space=smem, size = 0x200, scoped, tag = 'input window, operand 1, single buffered']
    #allocation8 [shape = 'u8[6144]{0}', space=vmem, size = 0x1800, scoped, tag = 'input window, operand 2']
    #allocation9 [shape = 'u8[6144]{0}', space=vmem, size = 0x1800, scoped, tag = 'output window, operand 0']
    %8 = vsyncpa [#allocation5], 0
    %9 = vsyncpa [#allocation6], 0
    %10 = vsyncpa [#allocation3], 0
    %s11 = scalar_lea.sflag [#allocation3], 1
    %12 = vsyncpa %s11, 0
    %13 = vsyncpa [#allocation4], 0
    %s14 = scalar_lea.sflag [#allocation4], 1
    %15 = vsyncpa %s14, 0
    loop: start=0, step=1, limit=4
    $region2: #{tpu_custom_call.1} parent=1 // loop_pre_header
      _
    $region3: #{tpu_custom_call.1} parent=1 // loop_header
      %s17 = sphi 0, %s21
      %p18 = scmp.ge.s32.totalorder %s17, 4
      %s24 = sphi 0, %s36
      %s25 = sphi 0, %s32
      %s26 = sphi 0, %s24
      %s27 = sphi 0, %s25
      %s28 = sphi 0, %s26
      %s29 = sphi 0, %s27
      %s37 = sphi 0, %s37
      %s39 = sphi 0, %s37
      %s40 = sphi 0, %s39
      %s54 = sphi 0, %s40
      %s58 = sphi 0, %s58
      %s60 = sphi 0, %s58
      %s61 = sphi 0, %s60
      %s75 = sphi 0, %s61
      %s83 = sphi 0, %s85
      %s86 = sphi 0, %s83
      %s87 = sphi 0, %s86
      %s103 = sphi 0, %s87
      %s111 = sphi 0, %s113
      %s114 = sphi 0, %s111
      %s115 = sphi 0, %s114
      %s131 = sphi 0, %s115
    $region4: #{tpu_custom_call.1} parent=1 // loop_header_branch
      %20 = sbr.rel (%p18) target = $region8
    $region5: #{tpu_custom_call.1} parent=1 // loop_body
      %s22 = ssub.s32 %s17, 1
      %s23 = ssub.s32 %s17, 2
      %s30 = sadd.s32 1, %s25
      %p31 = scmp.ge.s32.totalorder %s30, 1
      %s32 = scalar_select %p31, 0, %s30
      %s33 = sadd.s32 1, %s24
      %s34 = scalar_select %p31, %s33, %s24
      %p35 = scmp.ge.s32.totalorder %s34, 2
      %s36 = scalar_select %p35, 0, %s34
      %s38 = sadd.s32 %s37, 1
      %p41 = scmp.eq.s32.totalorder %s17, 1
      %p42 = scmp.ne.s32.totalorder %s37, %s39
      %p43 = scmp.eq.s32.totalorder %s17, 0
      %p44 = por %p42, %p43
      %p45 = scmp.ne.s32.totalorder %s37, %s39
      %p46 = scmp.eq.s32.totalorder %s22, 1
      %p47 = por %p45, %p46
      %p48 = scmp.ne.s32.totalorder %s39, %s40
      %p49 = scmp.eq.s32.totalorder %s22, 0
      %p50 = por %p48, %p49
      %p51 = scmp.ne.s32.totalorder %s39, %s40
      %p52 = scmp.eq.s32.totalorder %s23, 1
      %p53 = por %p51, %p52
      %p55 = scmp.ne.s32.totalorder %s40, %s54
      %p56 = scmp.eq.s32.totalorder %s23, 0
      %p57 = por %p55, %p56
      %s59 = sadd.s32 %s58, 1
      %p62 = scmp.eq.s32.totalorder %s17, 1
      %p63 = scmp.ne.s32.totalorder %s58, %s60
      %p64 = scmp.eq.s32.totalorder %s17, 0
      %p65 = por %p63, %p64
      %p66 = scmp.ne.s32.totalorder %s58, %s60
      %p67 = scmp.eq.s32.totalorder %s22, 1
      %p68 = por %p66, %p67
      %p69 = scmp.ne.s32.totalorder %s60, %s61
      %p70 = scmp.eq.s32.totalorder %s22, 0
      %p71 = por %p69, %p70
      %p72 = scmp.ne.s32.totalorder %s60, %s61
      %p73 = scmp.eq.s32.totalorder %s23, 1
      %p74 = por %p72, %p73
      %p76 = scmp.ne.s32.totalorder %s61, %s75
      %p77 = scmp.eq.s32.totalorder %s23, 0
      %p78 = por %p76, %p77
      %s79 = ssub.s32 %s24, %s36
      %s80 = ssub.s32 %s25, %s32
      %s81 = sor.u32 %s79, %s80
      %p82 = scmp.eq.s32.totalorder %s81, 0
      %s84 = sadd.s32 %s83, 1
      %s85 = scalar_select %p82, %s83, %s84
      %p88 = pneg %p82
      %p89 = scmp.eq.s32.totalorder %s17, 1
      %p90 = por %p88, %p89
      %p91 = scmp.ne.s32.totalorder %s83, %s86
      %p92 = scmp.eq.s32.totalorder %s17, 0
      %p93 = por %p91, %p92
      %p94 = scmp.ne.s32.totalorder %s83, %s86
      %p95 = scmp.eq.s32.totalorder %s22, 1
      %p96 = por %p94, %p95
      %p97 = scmp.ne.s32.totalorder %s86, %s87
      %p98 = scmp.eq.s32.totalorder %s22, 0
      %p99 = por %p97, %p98
      %p100 = scmp.ne.s32.totalorder %s86, %s87
      %p101 = scmp.eq.s32.totalorder %s23, 1
      %p102 = por %p100, %p101
      %p104 = scmp.ne.s32.totalorder %s87, %s103
      %p105 = scmp.eq.s32.totalorder %s23, 0
      %p106 = por %p104, %p105
      %s107 = ssub.s32 %s24, %s36
      %s108 = ssub.s32 %s25, %s32
      %s109 = sor.u32 %s107, %s108
      %p110 = scmp.eq.s32.totalorder %s109, 0
      %s112 = sadd.s32 %s111, 1
      %s113 = scalar_select %p110, %s111, %s112
      %p116 = pneg %p110
      %p117 = scmp.eq.s32.totalorder %s17, 1
      %p118 = por %p116, %p117
      %p119 = scmp.ne.s32.totalorder %s111, %s114
      %p120 = scmp.eq.s32.totalorder %s17, 0
      %p121 = por %p119, %p120
      %p122 = scmp.ne.s32.totalorder %s111, %s114
      %p123 = scmp.eq.s32.totalorder %s22, 1
      %p124 = por %p122, %p123
      %p125 = scmp.ne.s32.totalorder %s114, %s115
      %p126 = scmp.eq.s32.totalorder %s22, 0
      %p127 = por %p125, %p126
      %p128 = scmp.ne.s32.totalorder %s114, %s115
      %p129 = scmp.eq.s32.totalorder %s23, 1
      %p130 = por %p128, %p129
      %p132 = scmp.ne.s32.totalorder %s115, %s131
      %p133 = scmp.eq.s32.totalorder %s23, 0
      %p134 = por %p132, %p133
      %p135 = scmp.le.s32.totalorder 1, %s17
      %p136 = scmp.lt.s32.totalorder %s17, 3
      %p137 = pnand %p135, %p136
      %p138 = pneg %p137
      // Predicated region
      $region9: #{tpu_custom_call.1} parent=5 // pred_check
        _
      $region10: #{tpu_custom_call.1} parent=5 // pred_check_branch
        %140 = sbr.rel (%p137) target = $region12
      $region11: #{tpu_custom_call.1} parent=5 // pred_region
        %s141 = ssub.s32 %s17, 1
        // Predicated region
        $region13: #{tpu_custom_call.1} parent=11 // pred_check
          %p142 = pneg %p50
        $region14: #{tpu_custom_call.1} parent=11 // pred_check_branch
          %144 = sbr.rel (%p142) target = $region16
        $region15: #{tpu_custom_call.1} parent=11 // pred_region
          %s146 = ssub.s32 64, 64
          %147 = vsyncadd [#allocation5], %s146
          %150 = dma.hbm_to_smem %s0, 64, [#allocation2], [#allocation5]
        $region16: #{tpu_custom_call.1} parent=11 // pred_fallthru
          _
        // Predicated region
        $region17: #{tpu_custom_call.1} parent=11 // pred_check
          %p151 = pneg %p71
        $region18: #{tpu_custom_call.1} parent=11 // pred_check_branch
          %153 = sbr.rel (%p151) target = $region20
        $region19: #{tpu_custom_call.1} parent=11 // pred_region
          %s155 = ssub.s32 16, 16
          %156 = vsyncadd [#allocation6], %s155
          %s158 = sshll.u32 %s1, 4
          %s159 = int_to_ptr.vmem [resolvable:$true] %s158
          %161 = dma.vmem_to_smem %s159, 16, [#allocation7], [#allocation6]
        $region20: #{tpu_custom_call.1} parent=11 // pred_fallthru
          _
      $region12: #{tpu_custom_call.1} parent=5 // pred_fallthru
        _
      %p162 = scmp.lt.s32.totalorder %s17, 2
      // Predicated region
      $region21: #{tpu_custom_call.1} parent=5 // pred_check
        %p163 = pneg %p162
      $region22: #{tpu_custom_call.1} parent=5 // pred_check_branch
        %165 = sbr.rel (%p163) target = $region24
      $region23: #{tpu_custom_call.1} parent=5 // pred_region
        // Predicated region
        $region25: #{tpu_custom_call.1} parent=23 // pred_check
          %p166 = pneg %p93
        $region26: #{tpu_custom_call.1} parent=23 // pred_check_branch
          %168 = sbr.rel (%p166) target = $region28
        $region27: #{tpu_custom_call.1} parent=23 // pred_region
          %s169 = sand.u32 %s83, 1
          %s170 = scalar_lea.sflag [#allocation3], %s169
          %s171 = sand.u32 %s83, 1
          %s172 = smul.addr %s171, 6
          %s173 = scalar_lea.vmem [#allocation8], %s172
          %s175 = ssub.s32 96, 96
          %176 = vsyncadd %s170, %s175
          %s177 = smul.addr %s24, 3
          %s178 = sadd.s32 %s25, %s177
          %s179 = smul.addr %s178, 32
          %s180 = scalar_lea.hbm %s2, %s179
          %s181 = sshll.u32 %s173, 4
          %s182 = int_to_ptr.vmem [resolvable:$true] %s181
          %187 = dma.hbm_to_vmem [thread:$0]  %s180, 96, %s182, %s170, 32, 32, 2
        $region28: #{tpu_custom_call.1} parent=23 // pred_fallthru
          _
      $region24: #{tpu_custom_call.1} parent=5 // pred_fallthru
        _
      %p188 = scmp.le.s32.totalorder 1, %s17
      %p189 = scmp.lt.s32.totalorder %s17, 3
      %p190 = pnand %p188, %p189
      %p191 = pneg %p190
      // Predicated region
      $region29: #{tpu_custom_call.1} parent=5 // pred_check
        _
      $region30: #{tpu_custom_call.1} parent=5 // pred_check_branch
        %193 = sbr.rel (%p190) target = $region32
      $region31: #{tpu_custom_call.1} parent=5 // pred_region
        %s194 = ssub.s32 %s17, 1
        // Predicated region
        $region33: #{tpu_custom_call.1} parent=31 // pred_check
          %p195 = pneg %p50
        $region34: #{tpu_custom_call.1} parent=31 // pred_check_branch
          %197 = sbr.rel (%p195) target = $region36
        $region35: #{tpu_custom_call.1} parent=31 // pred_region
          %198 = dma.done [#allocation5], 64
        $region36: #{tpu_custom_call.1} parent=31 // pred_fallthru
          _
        // Predicated region
        $region37: #{tpu_custom_call.1} parent=31 // pred_check
          %p199 = pneg %p71
        $region38: #{tpu_custom_call.1} parent=31 // pred_check_branch
          %201 = sbr.rel (%p199) target = $region40
        $region39: #{tpu_custom_call.1} parent=31 // pred_region
          %202 = dma.done [#allocation6], 16
        $region40: #{tpu_custom_call.1} parent=31 // pred_fallthru
          _
        %s203 = sand.u32 %s86, 1
        %s204 = scalar_lea.sflag [#allocation3], %s203
        %s205 = sand.u32 %s86, 1
        %s206 = smul.addr %s205, 6
        %s207 = scalar_lea.vmem [#allocation8], %s206
        // Predicated region
        $region41: #{tpu_custom_call.1} parent=31 // pred_check
          %p208 = pneg %p99
        $region42: #{tpu_custom_call.1} parent=31 // pred_check_branch
          %210 = sbr.rel (%p208) target = $region44
        $region43: #{tpu_custom_call.1} parent=31 // pred_region
          %211 = dma.done %s204, 96
        $region44: #{tpu_custom_call.1} parent=31 // pred_fallthru
          _
        %212 = sfence
        %p213 = pneg %p50
        %p214 = pneg %p47
        %p215 = pneg %p71
        %p216 = pneg %p68
        %s217 = sand.u32 %s86, 1
        %s218 = scalar_lea.sflag [#allocation3], %s217
        %s219 = sand.u32 %s86, 1
        %s220 = smul.addr %s219, 6
        %s221 = scalar_lea.vmem [#allocation8], %s220
        %p222 = pneg %p99
        %p223 = pneg %p96
        %p224 = pneg %p127
        %p225 = pneg %p124
        %s226 = sand.u32 %s114, 1
        %s227 = scalar_lea.sflag [#allocation4], %s226
        %s228 = sand.u32 %s114, 1
        %s229 = smul.addr %s228, 6
        %s230 = scalar_lea.vmem [#allocation9], %s229
        %v231 = vld [vmem:[%s207] sm:$0x3]
        %s232 = sld [smem:[#allocation2]]
        %v233 = vstv %s232
        %v234 = vmul.f32 %v231, %v233
        %s235 = scalar_lea.vmem %s207, 2 [#allocation8]
        %v236 = vld [vmem:[%s235] sm:$0x3]
        %s237 = sld [smem:[#allocation2 + $0x1]]
        %v238 = vstv %s237
        %v239 = vmul.f32 %v236, %v238
        %v240 = vadd.f32 %v234, %v239
        %s241 = scalar_lea.vmem %s207, 4 [#allocation8]
        %v242 = vld [vmem:[%s241] sm:$0x3]
        %s243 = sld [smem:[#allocation2 + $0x2]]
        %v244 = vstv %s243
        %v245 = vmul.f32 %v242, %v244
        %v246 = vadd.f32 %v240, %v245
        %s247 = sld [smem:[#allocation7]]
        %v248 = vstv %s247
        %v249 = vadd.f32 %v246, %v248
        %250 = vst [vmem:[%s230] sm:$0x3] %v249
        %v251 = vld [vmem:[%s207] sm:$0x3]
        %s252 = sld [smem:[#allocation2 + $0x80]]
        %v253 = vstv %s252
        %v254 = vmul.f32 %v251, %v253
        %v255 = vld [vmem:[%s235] sm:$0x3]
        %s256 = sld [smem:[#allocation2 + $0x81]]
        %v257 = vstv %s256
        %v258 = vmul.f32 %v255, %v257
        %v259 = vadd.f32 %v254, %v258
        %v260 = vld [vmem:[%s241] sm:$0x3]
        %s261 = sld [smem:[#allocation2 + $0x82]]
        %v262 = vstv %s261
        %v263 = vmul.f32 %v260, %v262
        %v264 = vadd.f32 %v259, %v263
        %s265 = sld [smem:[#allocation7 + $0x1]]
        %v266 = vstv %s265
        %v267 = vadd.f32 %v264, %v266
        %s268 = scalar_lea.vmem %s230, 2 [#allocation9]
        %269 = vst [vmem:[%s268] sm:$0x3] %v267
        %v270 = vld [vmem:[%s207] sm:$0x3]
        %s271 = sld [smem:[#allocation2 + $0x100]]
        %v272 = vstv %s271
        %v273 = vmul.f32 %v270, %v272
        %v274 = vld [vmem:[%s235] sm:$0x3]
        %s275 = sld [smem:[#allocation2 + $0x101]]
        %v276 = vstv %s275
        %v277 = vmul.f32 %v274, %v276
        %v278 = vadd.f32 %v273, %v277
        %v279 = vld [vmem:[%s241] sm:$0x3]
        %s280 = sld [smem:[#allocation2 + $0x102]]
        %v281 = vstv %s280
        %v282 = vmul.f32 %v279, %v281
        %v283 = vadd.f32 %v278, %v282
        %s284 = sld [smem:[#allocation7 + $0x2]]
        %v285 = vstv %s284
        %v286 = vadd.f32 %v283, %v285
        %s287 = scalar_lea.vmem %s230, 4 [#allocation9]
        %288 = vst [vmem:[%s287] sm:$0x3] %v286
        %s289 = sand.u32 %s114, 1
        %s290 = scalar_lea.sflag [#allocation4], %s289
        %s291 = sand.u32 %s114, 1
        %s292 = smul.addr %s291, 6
        %s293 = scalar_lea.vmem [#allocation9], %s292
        // Predicated region
        $region45: #{tpu_custom_call.1} parent=31 // pred_check
          %p294 = pneg %p124
        $region46: #{tpu_custom_call.1} parent=31 // pred_check_branch
          %296 = sbr.rel (%p294) target = $region48
        $region47: #{tpu_custom_call.1} parent=31 // pred_region
          %s298 = ssub.s32 96, 96
          %299 = vsyncadd %s290, %s298
          %s300 = smul.addr %s26, 3
          %s301 = sadd.s32 %s27, %s300
          %s302 = smul.addr %s301, 32
          %s303 = scalar_lea.hbm %s3, %s302
          %s304 = sshll.u32 %s293, 4
          %s305 = int_to_ptr.vmem [resolvable:$true] %s304
          %310 = dma.vmem_to_hbm [thread:$0]  %s305, 96, %s303, %s290, 32, 32, 2
        $region48: #{tpu_custom_call.1} parent=31 // pred_fallthru
          _
      $region32: #{tpu_custom_call.1} parent=5 // pred_fallthru
        _
      %p311 = scmp.le.s32.totalorder 2, %s17
      // Predicated region
      $region49: #{tpu_custom_call.1} parent=5 // pred_check
        %p312 = pneg %p311
      $region50: #{tpu_custom_call.1} parent=5 // pred_check_branch
        %314 = sbr.rel (%p312) target = $region52
      $region51: #{tpu_custom_call.1} parent=5 // pred_region
        %s315 = ssub.s32 %s17, 2
        // Predicated region
        $region53: #{tpu_custom_call.1} parent=51 // pred_check
          %p316 = pneg %p130
        $region54: #{tpu_custom_call.1} parent=51 // pred_check_branch
          %318 = sbr.rel (%p316) target = $region56
        $region55: #{tpu_custom_call.1} parent=51 // pred_region
          %s319 = sand.u32 %s115, 1
          %s320 = scalar_lea.sflag [#allocation4], %s319
          %s321 = sand.u32 %s115, 1
          %s322 = smul.addr %s321, 6
          %s323 = scalar_lea.vmem [#allocation9], %s322
          %324 = dma.done %s320, 96
        $region56: #{tpu_custom_call.1} parent=51 // pred_fallthru
          _
      $region52: #{tpu_custom_call.1} parent=5 // pred_fallthru
        _
    $region6: #{tpu_custom_call.1} parent=1 // loop_footer
      %s21 = sadd.s32 1, %s17
    $region7: #{tpu_custom_call.1} parent=1 // loop_footer_branch
      %16 = sbr.rel target = $region3
    $region8: #{tpu_custom_call.1} parent=1 // loop_exit
      _
    %325 = vsyncpa [#allocation3], 1
    %s326 = scalar_lea.sflag [#allocation3], 1
    %327 = vsyncpa %s326, 1
    %328 = vsyncpa [#allocation4], 1
    %s329 = scalar_lea.sflag [#allocation4], 1
    %330 = vsyncpa %s329, 1
    %331 = vsyncpa [#allocation5], 1
    %s332 = scalar_lea.sflag [#allocation5], 1
    %333 = vsyncpa %s332, 1
    %334 = vsyncpa [#allocation6], 1
    %s335 = scalar_lea.sflag [#allocation6], 1
    %336 = vsyncpa %s335, 1

</llo_original>
